<compile_context>
chip_gen: v5e
topology: v5e:2x2
jax: 0.10.0
libtpu: 0.0.40
codegen_flags: <defaults>
</compile_context>

<pallas_src>
import math

import jax
import jax.numpy as jnp
from jax import lax
from jax.experimental import pallas as pl
from jax.experimental.pallas import tpu as pltpu


# -----------------------------------------------------------------------------
# Fused kernel: apply n_layers affine layers to one (C_in, TS) tile in VMEM.
# -----------------------------------------------------------------------------
def _make_fused_kernel(n_layers):
    def kernel(*refs):
        # refs = (x_ref, w0, b0, w1, b1, ..., o_ref)
        x_ref = refs[0]
        o_ref = refs[1 + 2 * n_layers]
        h = x_ref[...].astype(jnp.float32)                  # (C_i, TS)
        for i in range(n_layers):
            w = refs[1 + 2 * i][...].astype(jnp.float32)    # (N_i, C_i) native layout
            b = refs[2 + 2 * i][...]                        # (N_i, 1)   f32
            # y[n, t] = sum_c w[n, c] * h[c, t] + b[n]  (lane dim TS stays dense)
            h = lax.dot_general(
                w, h,
                dimension_numbers=(((1,), (0,)), ((), ())),
                preferred_element_type=jnp.float32,
            ) + b
        o_ref[...] = h.astype(o_ref.dtype)
    return kernel


def _spatial_tile(S, max_tile=1024):
    """Largest 128-multiple tile (<= max_tile) dividing S; whole-S fallback for
    small / ragged sizes (demo scale)."""
    if S % 128 != 0:
        # TODO(synk): pad/mask the last spatial tile for large S not divisible by 128.
        return S
    ts = 128
    while ts * 2 <= min(S, max_tile) and S % (ts * 2) == 0:
        ts *= 2
    return ts


def _fused_mlp_call(x3, weights, biases):
    """x3: (P, C_in, S). Applies the whole affine chain along axis 1 in one call."""
    P, C_in, S = x3.shape
    n_layers = len(weights)
    C_out = weights[-1].shape[0]
    ts = _spatial_tile(S)
    grid = (P, pl.cdiv(S, ts))

    in_specs = [pl.BlockSpec((None, C_in, ts), lambda p, s: (p, 0, s))]
    args = [x3]
    for w, b in zip(weights, biases):
        n, c = w.shape
        # Grid-invariant blocks (constant index_map): fetched once, VMEM-resident.
        in_specs.append(pl.BlockSpec((n, c), lambda p, s: (0, 0)))
        in_specs.append(pl.BlockSpec((n, 1), lambda p, s: (0, 0)))
        args.append(jnp.asarray(w))
        args.append(jnp.asarray(b, dtype=jnp.float32).reshape(n, 1))

    out_spec = pl.BlockSpec((None, C_out, ts), lambda p, s: (p, 0, s))

    return pl.pallas_call(
        _make_fused_kernel(n_layers),
        out_shape=jax.ShapeDtypeStruct((P, C_out, S), x3.dtype),
        grid_spec=pltpu.PrefetchScalarGridSpec(
            num_scalar_prefetch=0,
            grid=grid,
            in_specs=in_specs,
            out_specs=out_spec,
        ),
        compiler_params=pltpu.CompilerParams(
            dimension_semantics=("parallel", "parallel"),
        ),
    )(*args)


# -----------------------------------------------------------------------------
# Axis plumbing (pure reshapes; no transpose for the common dims=1 NCHW case)
# -----------------------------------------------------------------------------
def _mlp_along_axis(x, weights, biases, axis):
    nd = x.ndim
    swapped = False
    if axis == nd - 1 and nd >= 2:
        # Keep a wide axis in lanes: move the contraction axis off the last dim.
        x = jnp.swapaxes(x, -1, -2)
        axis = nd - 2
        swapped = True
    pre, C, post = x.shape[:axis], x.shape[axis], x.shape[axis + 1:]
    P, S = math.prod(pre), math.prod(post)
    y3 = _fused_mlp_call(x.reshape(P, C, S), weights, biases)
    y = y3.reshape(pre + (weights[-1].shape[0],) + post)
    if swapped:
        y = jnp.swapaxes(y, -1, -2)
    return y


def mlp_forward(x, weights, biases, dims):
    """Matches MLP.forward exactly (the reference discards its activation)."""
    n_layers = len(weights)
    if isinstance(dims, int):
        dims = [dims] * n_layers
    nd = x.ndim
    dims = [d % nd for d in dims]
    if all(d == dims[0] for d in dims):
        # Same contraction axis for every layer and no activation between them
        # -> fuse the whole chain into one kernel (no intermediate HBM traffic).
        return _mlp_along_axis(x, weights, biases, dims[0])
    # Mixed axes: apply layers one at a time (each still lane-dense).
    for i in range(n_layers):
        x = _mlp_along_axis(x, [weights[i]], [biases[i]], dims[i])
    return x


# -----------------------------------------------------------------------------
# Deterministic parameter init (same shapes as nn.Linear(in_f, out_f))
# -----------------------------------------------------------------------------
def init_params(key, in_features, out_features, dtype=jnp.float32):
    weights, biases = [], []
    for fi, fo in zip(in_features, out_features):
        kw, kb, key = jax.random.split(key, 3)
        bound = 1.0 / (fi ** 0.5)
        weights.append(jax.random.uniform(kw, (fo, fi), dtype, minval=-bound, maxval=bound))
        biases.append(jax.random.uniform(kb, (fo,), dtype, minval=-bound, maxval=bound))
    return weights, biases


if __name__ == "__main__":
    # Module config (satisfies test_paras: >= 2 layers, int dims)
    in_features = [4, 8]
    out_features = [8, 4]
    dims = 1                      # operate along the channel axis of NCHW

    key = jax.random.PRNGKey(0)
    kx, kp = jax.random.split(key)
    x = jax.random.normal(kx, (2, 4, 16, 16), dtype=jnp.float32)   # [B, C, H, W]
    weights, biases = init_params(kp, in_features, out_features)

    fwd = jax.jit(lambda xx: mlp_forward(xx, weights, biases, dims))
    out = jax.block_until_ready(fwd(x))

    # Pure-JAX reference (mirrors the PyTorch forward, activation discarded)
    def ref_forward(xx):
        d = [dims] * len(weights) if isinstance(dims, int) else dims
        for i in range(len(weights)):
            xx = jnp.swapaxes(xx, d[i], -1)
            xx = xx @ weights[i].T + biases[i]
            xx = jnp.swapaxes(xx, d[i], -1)
        return xx

    ref = ref_forward(x)
    assert out.shape == (2, 4, 16, 16), out.shape
    assert jnp.allclose(out, ref, atol=1e-5, rtol=1e-5), "mismatch vs reference"

    print("KERNEL_OK")
</pallas_src>

<mosaic_0001>
module attributes {stable_mosaic.version = 11 : i64} {
  func.func @kernel(%arg0: i32, %arg1: i32, %arg2: memref<1x4x256xf32, #tpu.memory_space<vmem>>, %arg3: memref<8x4xf32, #tpu.memory_space<vmem>>, %arg4: memref<8x1xf32, #tpu.memory_space<vmem>>, %arg5: memref<4x8xf32, #tpu.memory_space<vmem>>, %arg6: memref<4x1xf32, #tpu.memory_space<vmem>>, %arg7: memref<1x4x256xf32, #tpu.memory_space<vmem>>) attributes {dimension_semantics = [#tpu.dimension_semantics<parallel>, #tpu.dimension_semantics<parallel>], iteration_bounds = array<i64: 2, 1>, scalar_prefetch = 0 : i64, scratch_operands = 0 : i64, tpu.core_type = #tpu.core_type<tc>, window_params = [{transform_indices = @transform_0, window_bounds = array<i64: 1, 4, 256>}, {pipeline_mode = #tpu.pipeline_mode<synchronous>, transform_indices = @transform_1, window_bounds = array<i64: 8, 4>}, {pipeline_mode = #tpu.pipeline_mode<synchronous>, transform_indices = @transform_2, window_bounds = array<i64: 8, 1>}, {pipeline_mode = #tpu.pipeline_mode<synchronous>, transform_indices = @transform_3, window_bounds = array<i64: 4, 8>}, {pipeline_mode = #tpu.pipeline_mode<synchronous>, transform_indices = @transform_4, window_bounds = array<i64: 4, 1>}, {transform_indices = @transform_5, window_bounds = array<i64: 1, 4, 256>}]} {
    %c0 = arith.constant 0 : index
    %c0_0 = arith.constant 0 : index
    %c0_1 = arith.constant 0 : index
    %0 = vector.load %arg2[%c0, %c0_0, %c0_1] : memref<1x4x256xf32, #tpu.memory_space<vmem>>, vector<1x4x256xf32>
    %1 = vector.shape_cast %0 : vector<1x4x256xf32> to vector<4x256xf32>
    %c0_2 = arith.constant 0 : index
    %c0_3 = arith.constant 0 : index
    %2 = vector.load %arg3[%c0_2, %c0_3] : memref<8x4xf32, #tpu.memory_space<vmem>>, vector<8x4xf32>
    %c0_4 = arith.constant 0 : index
    %c0_5 = arith.constant 0 : index
    %3 = vector.load %arg4[%c0_4, %c0_5] : memref<8x1xf32, #tpu.memory_space<vmem>>, vector<8x1xf32>
    %cst = arith.constant dense<0.000000e+00> : vector<8x256xf32>
    %4 = tpu.matmul %2, %1, %cst {dimension_numbers = #tpu.dot_dimension_numbers<[1], [0], [0], [1], [0, 0, 1, 1], [], []>} : vector<8x4xf32>, vector<4x256xf32>, vector<8x256xf32> -> vector<8x256xf32>
    %5 = vector.broadcast %3 : vector<8x1xf32> to vector<8x256xf32>
    %6 = arith.addf %4, %5 : vector<8x256xf32>
    %c0_6 = arith.constant 0 : index
    %c0_7 = arith.constant 0 : index
    %7 = vector.load %arg5[%c0_6, %c0_7] : memref<4x8xf32, #tpu.memory_space<vmem>>, vector<4x8xf32>
    %c0_8 = arith.constant 0 : index
    %c0_9 = arith.constant 0 : index
    %8 = vector.load %arg6[%c0_8, %c0_9] : memref<4x1xf32, #tpu.memory_space<vmem>>, vector<4x1xf32>
    %cst_10 = arith.constant dense<0.000000e+00> : vector<4x256xf32>
    %9 = tpu.matmul %7, %6, %cst_10 {dimension_numbers = #tpu.dot_dimension_numbers<[1], [0], [0], [1], [0, 0, 1, 1], [], []>} : vector<4x8xf32>, vector<8x256xf32>, vector<4x256xf32> -> vector<4x256xf32>
    %10 = vector.broadcast %8 : vector<4x1xf32> to vector<4x256xf32>
    %11 = arith.addf %9, %10 : vector<4x256xf32>
    %c0_11 = arith.constant 0 : index
    %c0_12 = arith.constant 0 : index
    %c0_13 = arith.constant 0 : index
    %12 = vector.load %arg7[%c0_11, %c0_12, %c0_13] : memref<1x4x256xf32, #tpu.memory_space<vmem>>, vector<1x4x256xf32>
    %13 = vector.shape_cast %12 : vector<1x4x256xf32> to vector<4x256xf32>
    %14 = vector.shape_cast %11 : vector<4x256xf32> to vector<1x4x256xf32>
    tpu.vector_store %arg7[%c0_11, %c0_12, %c0_13], %14 {strides = array<i32>} : memref<1x4x256xf32, #tpu.memory_space<vmem>>, vector<1x4x256xf32>,
    return
  }
  func.func @transform_0(%arg0: i32, %arg1: i32) -> (i32, i32, i32) {
    %c0_i32 = arith.constant 0 : i32
    %c0_i32_0 = arith.constant 0 : i32
    return %arg0, %c0_i32, %arg1 : i32, i32, i32
  }
  func.func @transform_1(%arg0: i32, %arg1: i32) -> (i32, i32) {
    %c0_i32 = arith.constant 0 : i32
    %c0_i32_0 = arith.constant 0 : i32
    %c0_i32_1 = arith.constant 0 : i32
    return %c0_i32, %c0_i32_0 : i32, i32
  }
  func.func @transform_2(%arg0: i32, %arg1: i32) -> (i32, i32) {
    %c0_i32 = arith.constant 0 : i32
    %c0_i32_0 = arith.constant 0 : i32
    %c0_i32_1 = arith.constant 0 : i32
    return %c0_i32, %c0_i32_0 : i32, i32
  }
  func.func @transform_3(%arg0: i32, %arg1: i32) -> (i32, i32) {
    %c0_i32 = arith.constant 0 : i32
    %c0_i32_0 = arith.constant 0 : i32
    %c0_i32_1 = arith.constant 0 : i32
    return %c0_i32, %c0_i32_0 : i32, i32
  }
  func.func @transform_4(%arg0: i32, %arg1: i32) -> (i32, i32) {
    %c0_i32 = arith.constant 0 : i32
    %c0_i32_0 = arith.constant 0 : i32
    %c0_i32_1 = arith.constant 0 : i32
    return %c0_i32, %c0_i32_0 : i32, i32
  }
  func.func @transform_5(%arg0: i32, %arg1: i32) -> (i32, i32, i32) {
    %c0_i32 = arith.constant 0 : i32
    %c0_i32_0 = arith.constant 0 : i32
    return %arg0, %c0_i32, %arg1 : i32, i32, i32
  }
}

</mosaic_0001>

<llo_original>
// kernel: _lambda_.1
$region0: #{_lambda_.1}
  #allocation0 [shape = 'u32[]', space=smem, size = 0x4, offset = 0x4, fixed_abs, tag = 'smem constant byte address 0x4 - core index']
  #allocation1 [shape = 'u32[72,128]{1,0:T(1,128)}', space=vmem, size = 0x9000, scoped, tag = 'internal scratch']
  %s0 = inlined_call_operand.vmem [shape: f32[2,4,256], index: 0, kind: input, shape index: {}]
  %s1 = inlined_call_operand.vmem [shape: f32[8,4], index: 1, kind: input, shape index: {}]
  %s2 = inlined_call_operand.vmem [shape: f32[8,1], index: 2, kind: input, shape index: {}]
  %s3 = inlined_call_operand.vmem [shape: f32[4,8], index: 3, kind: input, shape index: {}]
  %s4 = inlined_call_operand.vmem [shape: f32[4,1], index: 4, kind: input, shape index: {}]
  %s5 = inlined_call_operand.vmem [shape: f32[2,4,256], index: 5, kind: output, shape index: {}]
  %s6 = sld [smem:[#allocation0]]
  $region53: #{_lambda_.1} parent=0
    _
  %s8 = ssub.s32 1, %s6
  %s9 = scalar_select 0, %s8, %s6
  loop: start=0, step=1, limit=4
  $region2: #{_lambda_.1} parent=0 // loop_pre_header
    _
  $region3: #{_lambda_.1} parent=0 // loop_header
    %s11 = sphi 0, %s15
    %p12 = scmp.ge.s32.totalorder %s11, 4
    %s18 = sphi 0, %s30
    %s19 = sphi 0, %s26
    %s20 = sphi 0, %s18
    %s21 = sphi 0, %s19
    %s22 = sphi 0, %s20
    %s23 = sphi 0, %s21
    %s35 = sphi 0, %s37
    %s38 = sphi 0, %s35
    %s39 = sphi 0, %s38
    %s55 = sphi 0, %s39
    %s59 = sphi 0, %s59
    %s61 = sphi 0, %s59
    %s62 = sphi 0, %s61
    %s76 = sphi 0, %s62
    %s80 = sphi 0, %s80
    %s82 = sphi 0, %s80
    %s83 = sphi 0, %s82
    %s97 = sphi 0, %s83
    %s101 = sphi 0, %s101
    %s103 = sphi 0, %s101
    %s104 = sphi 0, %s103
    %s118 = sphi 0, %s104
    %s122 = sphi 0, %s122
    %s124 = sphi 0, %s122
    %s125 = sphi 0, %s124
    %s139 = sphi 0, %s125
    %s147 = sphi 0, %s149
    %s150 = sphi 0, %s147
    %s151 = sphi 0, %s150
    %s167 = sphi 0, %s151
  $region4: #{_lambda_.1} parent=0 // loop_header_branch
    %14 = sbr.rel (%p12) target = $region8
  $region5: #{_lambda_.1} parent=0 // loop_body
    %s16 = ssub.s32 %s11, 1
    %s17 = ssub.s32 %s11, 2
    %s24 = sadd.s32 1, %s19
    %p25 = scmp.ge.s32.totalorder %s24, 1
    %s26 = scalar_select %p25, 0, %s24
    %s27 = sadd.s32 1, %s18
    %s28 = scalar_select %p25, %s27, %s18
    %p29 = scmp.ge.s32.totalorder %s28, 2
    %s30 = scalar_select %p29, 0, %s28
    %s31 = ssub.s32 %s18, %s30
    %s32 = ssub.s32 %s19, %s26
    %s33 = sor.u32 %s31, %s32
    %p34 = scmp.eq.s32.totalorder %s33, 0
    %s36 = sadd.s32 %s35, 1
    %s37 = scalar_select %p34, %s35, %s36
    %p40 = pneg %p34
    %p41 = scmp.eq.s32.totalorder %s11, 1
    %p42 = por %p40, %p41
    %p43 = scmp.ne.s32.totalorder %s35, %s38
    %p44 = scmp.eq.s32.totalorder %s11, 0
    %p45 = por %p43, %p44
    %p46 = scmp.ne.s32.totalorder %s35, %s38
    %p47 = scmp.eq.s32.totalorder %s16, 1
    %p48 = por %p46, %p47
    %p49 = scmp.ne.s32.totalorder %s38, %s39
    %p50 = scmp.eq.s32.totalorder %s16, 0
    %p51 = por %p49, %p50
    %p52 = scmp.ne.s32.totalorder %s38, %s39
    %p53 = scmp.eq.s32.totalorder %s17, 1
    %p54 = por %p52, %p53
    %p56 = scmp.ne.s32.totalorder %s39, %s55
    %p57 = scmp.eq.s32.totalorder %s17, 0
    %p58 = por %p56, %p57
    %s60 = sadd.s32 %s59, 1
    %p63 = scmp.eq.s32.totalorder %s11, 1
    %p64 = scmp.ne.s32.totalorder %s59, %s61
    %p65 = scmp.eq.s32.totalorder %s11, 0
    %p66 = por %p64, %p65
    %p67 = scmp.ne.s32.totalorder %s59, %s61
    %p68 = scmp.eq.s32.totalorder %s16, 1
    %p69 = por %p67, %p68
    %p70 = scmp.ne.s32.totalorder %s61, %s62
    %p71 = scmp.eq.s32.totalorder %s16, 0
    %p72 = por %p70, %p71
    %p73 = scmp.ne.s32.totalorder %s61, %s62
    %p74 = scmp.eq.s32.totalorder %s17, 1
    %p75 = por %p73, %p74
    %p77 = scmp.ne.s32.totalorder %s62, %s76
    %p78 = scmp.eq.s32.totalorder %s17, 0
    %p79 = por %p77, %p78
    %s81 = sadd.s32 %s80, 1
    %p84 = scmp.eq.s32.totalorder %s11, 1
    %p85 = scmp.ne.s32.totalorder %s80, %s82
    %p86 = scmp.eq.s32.totalorder %s11, 0
    %p87 = por %p85, %p86
    %p88 = scmp.ne.s32.totalorder %s80, %s82
    %p89 = scmp.eq.s32.totalorder %s16, 1
    %p90 = por %p88, %p89
    %p91 = scmp.ne.s32.totalorder %s82, %s83
    %p92 = scmp.eq.s32.totalorder %s16, 0
    %p93 = por %p91, %p92
    %p94 = scmp.ne.s32.totalorder %s82, %s83
    %p95 = scmp.eq.s32.totalorder %s17, 1
    %p96 = por %p94, %p95
    %p98 = scmp.ne.s32.totalorder %s83, %s97
    %p99 = scmp.eq.s32.totalorder %s17, 0
    %p100 = por %p98, %p99
    %s102 = sadd.s32 %s101, 1
    %p105 = scmp.eq.s32.totalorder %s11, 1
    %p106 = scmp.ne.s32.totalorder %s101, %s103
    %p107 = scmp.eq.s32.totalorder %s11, 0
    %p108 = por %p106, %p107
    %p109 = scmp.ne.s32.totalorder %s101, %s103
    %p110 = scmp.eq.s32.totalorder %s16, 1
    %p111 = por %p109, %p110
    %p112 = scmp.ne.s32.totalorder %s103, %s104
    %p113 = scmp.eq.s32.totalorder %s16, 0
    %p114 = por %p112, %p113
    %p115 = scmp.ne.s32.totalorder %s103, %s104
    %p116 = scmp.eq.s32.totalorder %s17, 1
    %p117 = por %p115, %p116
    %p119 = scmp.ne.s32.totalorder %s104, %s118
    %p120 = scmp.eq.s32.totalorder %s17, 0
    %p121 = por %p119, %p120
    %s123 = sadd.s32 %s122, 1
    %p126 = scmp.eq.s32.totalorder %s11, 1
    %p127 = scmp.ne.s32.totalorder %s122, %s124
    %p128 = scmp.eq.s32.totalorder %s11, 0
    %p129 = por %p127, %p128
    %p130 = scmp.ne.s32.totalorder %s122, %s124
    %p131 = scmp.eq.s32.totalorder %s16, 1
    %p132 = por %p130, %p131
    %p133 = scmp.ne.s32.totalorder %s124, %s125
    %p134 = scmp.eq.s32.totalorder %s16, 0
    %p135 = por %p133, %p134
    %p136 = scmp.ne.s32.totalorder %s124, %s125
    %p137 = scmp.eq.s32.totalorder %s17, 1
    %p138 = por %p136, %p137
    %p140 = scmp.ne.s32.totalorder %s125, %s139
    %p141 = scmp.eq.s32.totalorder %s17, 0
    %p142 = por %p140, %p141
    %s143 = ssub.s32 %s18, %s30
    %s144 = ssub.s32 %s19, %s26
    %s145 = sor.u32 %s143, %s144
    %p146 = scmp.eq.s32.totalorder %s145, 0
    %s148 = sadd.s32 %s147, 1
    %s149 = scalar_select %p146, %s147, %s148
    %p152 = pneg %p146
    %p153 = scmp.eq.s32.totalorder %s11, 1
    %p154 = por %p152, %p153
    %p155 = scmp.ne.s32.totalorder %s147, %s150
    %p156 = scmp.eq.s32.totalorder %s11, 0
    %p157 = por %p155, %p156
    %p158 = scmp.ne.s32.totalorder %s147, %s150
    %p159 = scmp.eq.s32.totalorder %s16, 1
    %p160 = por %p158, %p159
    %p161 = scmp.ne.s32.totalorder %s150, %s151
    %p162 = scmp.eq.s32.totalorder %s16, 0
    %p163 = por %p161, %p162
    %p164 = scmp.ne.s32.totalorder %s150, %s151
    %p165 = scmp.eq.s32.totalorder %s17, 1
    %p166 = por %p164, %p165
    %p168 = scmp.ne.s32.totalorder %s151, %s167
    %p169 = scmp.eq.s32.totalorder %s17, 0
    %p170 = por %p168, %p169
    %p171 = scmp.le.s32.totalorder 1, %s11
    %p172 = scmp.lt.s32.totalorder %s11, 3
    %p173 = pnand %p171, %p172
    %p174 = pneg %p173
    // Predicated region
    $region9: #{_lambda_.1} parent=5 // pred_check
      _
    $region10: #{_lambda_.1} parent=5 // pred_check_branch
      %176 = sbr.rel (%p173) target = $region12
    $region11: #{_lambda_.1} parent=5 // pred_region
      %s177 = ssub.s32 %s11, 1
      // Predicated region
      $region13: #{_lambda_.1} parent=11 // pred_check
        %p178 = pneg %p72
      $region14: #{_lambda_.1} parent=11 // pred_check_branch
        %180 = sbr.rel (%p178) target = $region16
      $region15: #{_lambda_.1} parent=11 // pred_region
        _
      $region16: #{_lambda_.1} parent=11 // pred_fallthru
        _
      // Predicated region
      $region17: #{_lambda_.1} parent=11 // pred_check
        %p181 = pneg %p93
      $region18: #{_lambda_.1} parent=11 // pred_check_branch
        %183 = sbr.rel (%p181) target = $region20
      $region19: #{_lambda_.1} parent=11 // pred_region
        _
      $region20: #{_lambda_.1} parent=11 // pred_fallthru
        _
      // Predicated region
      $region21: #{_lambda_.1} parent=11 // pred_check
        %p184 = pneg %p114
      $region22: #{_lambda_.1} parent=11 // pred_check_branch
        %186 = sbr.rel (%p184) target = $region24
      $region23: #{_lambda_.1} parent=11 // pred_region
        _
      $region24: #{_lambda_.1} parent=11 // pred_fallthru
        _
      // Predicated region
      $region25: #{_lambda_.1} parent=11 // pred_check
        %p187 = pneg %p135
      $region26: #{_lambda_.1} parent=11 // pred_check_branch
        %189 = sbr.rel (%p187) target = $region28
      $region27: #{_lambda_.1} parent=11 // pred_region
        _
      $region28: #{_lambda_.1} parent=11 // pred_fallthru
        _
    $region12: #{_lambda_.1} parent=5 // pred_fallthru
      _
    %p190 = scmp.lt.s32.totalorder %s11, 2
    // Predicated region
    $region29: #{_lambda_.1} parent=5 // pred_check
      %p191 = pneg %p190
    $region30: #{_lambda_.1} parent=5 // pred_check_branch
      %193 = sbr.rel (%p191) target = $region32
    $region31: #{_lambda_.1} parent=5 // pred_region
      // Predicated region
      $region33: #{_lambda_.1} parent=31 // pred_check
        %p194 = pneg %p45
      $region34: #{_lambda_.1} parent=31 // pred_check_branch
        %196 = sbr.rel (%p194) target = $region36
      $region35: #{_lambda_.1} parent=31 // pred_region
        %s197 = smul.u32 2, %s19
        %p198 = scmp.lt.s32.totalorder %s18, 1
        %s199 = scalar_select %p198, %s18, 1
        %p200 = scmp.lt.s32.totalorder %s197, 1
        %s201 = scalar_select %p200, %s197, 1
        %s202 = smul.addr %s199, 2
        %s203 = sadd.s32 %s201, %s202
        %s204 = smul.addr %s203, 4
        %s205 = scalar_lea.vmem %s0, %s204
        %s206 = smul.u32 2, %s19
      $region36: #{_lambda_.1} parent=31 // pred_fallthru
        _
    $region32: #{_lambda_.1} parent=5 // pred_fallthru
      _
    %p207 = scmp.le.s32.totalorder 1, %s11
    %p208 = scmp.lt.s32.totalorder %s11, 3
    %p209 = pnand %p207, %p208
    %p210 = pneg %p209
    // Predicated region
    $region37: #{_lambda_.1} parent=5 // pred_check
      _
    $region38: #{_lambda_.1} parent=5 // pred_check_branch
      %212 = sbr.rel (%p209) target = $region40
    $region39: #{_lambda_.1} parent=5 // pred_region
      %s213 = ssub.s32 %s11, 1
      %s214 = smul.u32 2, %s21
      %p215 = scmp.lt.s32.totalorder %s20, 1
      %s216 = scalar_select %p215, %s20, 1
      %p217 = scmp.lt.s32.totalorder %s214, 1
      %s218 = scalar_select %p217, %s214, 1
      %s219 = smul.addr %s216, 2
      %s220 = sadd.s32 %s218, %s219
      %s221 = smul.addr %s220, 4
      %s222 = scalar_lea.vmem %s0, %s221
      %p223 = pneg %p51
      %p224 = pneg %p48
      %p225 = pneg %p72
      %p226 = pneg %p69
      %p227 = pneg %p93
      %p228 = pneg %p90
      %p229 = pneg %p114
      %p230 = pneg %p111
      %p231 = pneg %p135
      %p232 = pneg %p132
      %p233 = pneg %p163
      %p234 = pneg %p160
      %s235 = smul.u32 2, %s21
      %p236 = scmp.lt.s32.totalorder %s20, 1
      %s237 = scalar_select %p236, %s20, 1
      %p238 = scmp.lt.s32.totalorder %s235, 1
      %s239 = scalar_select %p238, %s235, 1
      %s240 = smul.addr %s237, 2
      %s241 = sadd.s32 %s239, %s240
      %s242 = smul.addr %s241, 4
      %s243 = scalar_lea.vmem %s5, %s242
      %s244 = smul.u32 2, %s21
      %p245 = scmp.lt.s32.totalorder %s20, 1
      %s246 = scalar_select %p245, %s20, 1
      %p247 = scmp.lt.s32.totalorder %s244, 1
      %s248 = scalar_select %p247, %s244, 1
      %s249 = smul.addr %s246, 2
      %s250 = sadd.s32 %s248, %s249
      %s251 = smul.addr %s250, 4
      %s252 = scalar_lea.vmem %s0, %s251
      %s253 = smul.u32 2, %s21
      %s254 = smul.u32 2, %s21
      %p255 = scmp.lt.s32.totalorder %s20, 1
      %s256 = scalar_select %p255, %s20, 1
      %p257 = scmp.lt.s32.totalorder %s254, 1
      %s258 = scalar_select %p257, %s254, 1
      %s259 = smul.addr %s256, 2
      %s260 = sadd.s32 %s258, %s259
      %s261 = smul.addr %s260, 4
      %s262 = scalar_lea.vmem %s5, %s261
      %s263 = smul.u32 2, %s21
      %v264 = vld [vmem:[%s252] sm:$0xff]
      %v265 = vld [vmem:[%s1] sm:$0xff]
      %v266 = vld [vmem:[%s2] sm:$0xff]
      %268 = vset.pattern.permute.xlu0 0
      %269 = vperm.xlu0 %268, %v266
      %v270 = vpop.permute.xlu0 %269
      %273 = vst [vmem:[#allocation1] ss:$2 sm:$0xff] %v264
      %v274 = vld.sshfl [vmem:[#allocation1] sm:$0xff pattern:$0x75316420]
      %v275 = vld.sshfl [vmem:[#allocation1 + $0x8] sm:$0xff pattern:$0x75316420]
      %vm276 = vcmask 31744
      %v278 = vsel %vm276, %v265, 0
      %vm280 = vcmask 1043456
      %v281 = vsel %vm280, %v274, 0
      %v283 = vsel %vm280, %v275, 0
      %285 = vmatpush.msra.mxu0 0.0
      %286 = vmatpush.msra.mxu0 0.0
      %287 = vmatpush.msra.mxu0 0.0
      %288 = vmatpush.msra.mxu0 0.0
      %289 = vmatpush.msra.mxu0 0.0
      %290 = vmatpush.msra.mxu0 0.0
      %291 = vmatpush.msra.mxu0 0.0
      %292 = vmatpush.msra.mxu0 0.0
      %293 = vmatpush.msra.mxu0 0.0
      %294 = vmatpush.msra.mxu0 0.0
      %295 = vmatpush.msra.mxu0 0.0
      %296 = vmatpush.msra.mxu0 0.0
      %297 = vmatpush.msra.mxu0 0.0
      %298 = vmatpush.msra.mxu0 0.0
      %299 = vmatpush.msra.mxu0 0.0
      %300 = vmatpush.msra.mxu0 %v281
      %301 = vmatmul.f32.gmra.mxu0 %v278
      %v302 = vpop.f32.mrf.mxu0
      %v303 = vadd.f32 %v270, %v302
      %304 = vdwg.mxu0
      %305 = vmatpush.msra.mxu0 0.0
      %306 = vmatpush.msra.mxu0 0.0
      %307 = vmatpush.msra.mxu0 0.0
      %308 = vmatpush.msra.mxu0 0.0
      %309 = vmatpush.msra.mxu0 0.0
      %310 = vmatpush.msra.mxu0 0.0
      %311 = vmatpush.msra.mxu0 0.0
      %312 = vmatpush.msra.mxu0 0.0
      %313 = vmatpush.msra.mxu0 0.0
      %314 = vmatpush.msra.mxu0 0.0
      %315 = vmatpush.msra.mxu0 0.0
      %316 = vmatpush.msra.mxu0 0.0
      %317 = vmatpush.msra.mxu0 0.0
      %318 = vmatpush.msra.mxu0 0.0
      %319 = vmatpush.msra.mxu0 0.0
      %320 = vmatpush.msra.mxu0 %v283
      %321 = vmatmul.f32.gmra.mxu0 %v278
      %v322 = vpop.f32.mrf.mxu0
      %v323 = vadd.f32 %v270, %v322
      %324 = vdwg.mxu0
      %v325 = vld [vmem:[%s3] sm:$0xf]
      %v326 = vld [vmem:[%s4] sm:$0xf]
      %328 = vset.pattern.permute.xlu0 0
      %329 = vperm.xlu0 %328, %v326
      %v330 = vpop.permute.xlu0 %329
      %vm332 = vcmask 64512
      %v334 = vsel %vm332, %v325, 0
      %336 = vmatpush.msra.mxu0 0.0
      %337 = vmatpush.msra.mxu0 0.0
      %338 = vmatpush.msra.mxu0 0.0
      %339 = vmatpush.msra.mxu0 0.0
      %340 = vmatpush.msra.mxu0 0.0
      %341 = vmatpush.msra.mxu0 0.0
      %342 = vmatpush.msra.mxu0 0.0
      %343 = vmatpush.msra.mxu0 0.0
      %344 = vmatpush.msra.mxu0 0.0
      %345 = vmatpush.msra.mxu0 0.0
      %346 = vmatpush.msra.mxu0 0.0
      %347 = vmatpush.msra.mxu0 0.0
      %348 = vmatpush.msra.mxu0 0.0
      %349 = vmatpush.msra.mxu0 0.0
      %350 = vmatpush.msra.mxu0 0.0
      %351 = vmatpush.msra.mxu0 %v303
      %352 = vmatmul.f32.gmra.mxu0 %v334
      %v353 = vpop.f32.mrf.mxu0
      %v354 = vadd.f32 %v330, %v353
      %355 = vdwg.mxu0
      %356 = vmatpush.msra.mxu0 0.0
      %357 = vmatpush.msra.mxu0 0.0
      %358 = vmatpush.msra.mxu0 0.0
      %359 = vmatpush.msra.mxu0 0.0
      %360 = vmatpush.msra.mxu0 0.0
      %361 = vmatpush.msra.mxu0 0.0
      %362 = vmatpush.msra.mxu0 0.0
      %363 = vmatpush.msra.mxu0 0.0
      %364 = vmatpush.msra.mxu0 0.0
      %365 = vmatpush.msra.mxu0 0.0
      %366 = vmatpush.msra.mxu0 0.0
      %367 = vmatpush.msra.mxu0 0.0
      %368 = vmatpush.msra.mxu0 0.0
      %369 = vmatpush.msra.mxu0 0.0
      %370 = vmatpush.msra.mxu0 0.0
      %371 = vmatpush.msra.mxu0 %v323
      %372 = vmatmul.f32.gmra.mxu0 %v334
      %v373 = vpop.f32.mrf.mxu0
      %v374 = vadd.f32 %v330, %v373
      %375 = vdwg.mxu0
      %v378 = vrot.slane %v374, 4
      %v379 = vsel %vm280, %v354, %v378
      %381 = vst [vmem:[%s262] sm:$0xff] %v379
      %s382 = smul.u32 2, %s21
      %p383 = scmp.lt.s32.totalorder %s20, 1
      %s384 = scalar_select %p383, %s20, 1
      %p385 = scmp.lt.s32.totalorder %s382, 1
      %s386 = scalar_select %p385, %s382, 1
      %s387 = smul.addr %s384, 2
      %s388 = sadd.s32 %s386, %s387
      %s389 = smul.addr %s388, 4
      %s390 = scalar_lea.vmem %s5, %s389
      // Predicated region
      $region41: #{_lambda_.1} parent=39 // pred_check
        %p391 = pneg %p160
      $region42: #{_lambda_.1} parent=39 // pred_check_branch
        %393 = sbr.rel (%p391) target = $region44
      $region43: #{_lambda_.1} parent=39 // pred_region
        %s394 = smul.u32 2, %s21
      $region44: #{_lambda_.1} parent=39 // pred_fallthru
        _
    $region40: #{_lambda_.1} parent=5 // pred_fallthru
      _
    %p395 = scmp.le.s32.totalorder 2, %s11
    // Predicated region
    $region45: #{_lambda_.1} parent=5 // pred_check
      %p396 = pneg %p395
    $region46: #{_lambda_.1} parent=5 // pred_check_branch
      %398 = sbr.rel (%p396) target = $region48
    $region47: #{_lambda_.1} parent=5 // pred_region
      %s399 = ssub.s32 %s11, 2
      // Predicated region
      $region49: #{_lambda_.1} parent=47 // pred_check
        %p400 = pneg %p166
      $region50: #{_lambda_.1} parent=47 // pred_check_branch
        %402 = sbr.rel (%p400) target = $region52
      $region51: #{_lambda_.1} parent=47 // pred_region
        %s403 = smul.u32 2, %s23
        %p404 = scmp.lt.s32.totalorder %s22, 1
        %s405 = scalar_select %p404, %s22, 1
        %p406 = scmp.lt.s32.totalorder %s403, 1
        %s407 = scalar_select %p406, %s403, 1
        %s408 = smul.addr %s405, 2
        %s409 = sadd.s32 %s407, %s408
        %s410 = smul.addr %s409, 4
        %s411 = scalar_lea.vmem %s5, %s410
      $region52: #{_lambda_.1} parent=47 // pred_fallthru
        _
    $region48: #{_lambda_.1} parent=5 // pred_fallthru
      _
  $region6: #{_lambda_.1} parent=0 // loop_footer
    %s15 = sadd.s32 1, %s11
  $region7: #{_lambda_.1} parent=0 // loop_footer_branch
    %10 = sbr.rel target = $region3
  $region8: #{_lambda_.1} parent=0 // loop_exit
    _

</llo_original>
